<compile_context>
chip_gen: v7x
topology: tpu7x:2x2x1
jax: 0.10.0
libtpu: 0.0.40
codegen_flags: <defaults>
</compile_context>

<pallas_src>
import math

import jax
import jax.numpy as jnp
import numpy as np
from jax.experimental import pallas as pl
from jax.experimental.pallas import tpu as pltpu


def _pos_embed_sine_kernel(tab_y_ref, tab_x_ref, o_ref):
    """Write one (C, TH, W) output block (batch dim squeezed by the BlockSpec).

    tab_y_ref: (F, TH, 1)  -- per-row values for this row tile (y half of channels)
    tab_x_ref: (F, 1,  W)  -- per-column values (x half of channels)
    o_ref:     (C, TH, W)  with C == 2F
    Pure broadcast-store: no transcendentals, no cross-lane shuffles.
    """
    F, TH, _ = tab_y_ref.shape
    W = tab_x_ref.shape[-1]
    # y half: lane-broadcast each row's value across the W lanes.
    o_ref[:F, :, :] = jnp.broadcast_to(tab_y_ref[...], (F, TH, W))
    # x half: tile the per-column table across the TH rows (sublane broadcast).
    o_ref[F:, :, :] = jnp.broadcast_to(tab_x_ref[...], (F, TH, W))


def _choose_row_tile(H, W, C, B):
    """Pick TH (rows per block): multiple of 8 (or full H), ~<=2 MiB per block,
    and >= 2 total grid steps when possible so v7x's two TensorCores both work."""
    target_bytes = 2 * 1024 * 1024
    max_th = max(1, target_bytes // (C * W * 4))
    if H % 8 == 0 and H >= 8:
        th = min(H, max(8, (max_th // 8) * 8))
        if B == 1 and th == H and H >= 16:
            th = ((H // 2 + 7) // 8) * 8   # force >= 2 row tiles
        return th
    # H not sublane-aligned: full-extent block is always legal.
    return H


def position_embedding_sine(x, num_pos_feats=64, temperature=10000,
                            normalize=False, scale=None):
    """Pallas implementation of PositionEmbeddingSine.forward(x, mask=None)."""
    if scale is not None and normalize is False:
        raise ValueError('normalize should be True if scale is passed')
    if scale is None:
        scale = 2 * math.pi

    B, _, H, W = x.shape
    F = num_pos_feats
    C = 2 * F

    # ---- Trace-time (numpy) separable tables --------------------------------
    k = np.arange(F, dtype=np.float64)
    inv_dim_t = 1.0 / (float(temperature) ** (2.0 * np.floor(k / 2.0) / float(F)))

    if normalize:
        eps = 1e-6
        ny = float(scale) / (float(H) + eps)
        nx = float(scale) / (float(W) + eps)
    else:
        ny = 1.0
        nx = 1.0

    y_embed = (np.arange(H, dtype=np.float64) + 1.0) * ny   # (H,)
    x_embed = (np.arange(W, dtype=np.float64) + 1.0) * nx   # (W,)

    ang_y = inv_dim_t[:, None] * y_embed[None, :]            # (F, H)
    ang_x = inv_dim_t[:, None] * x_embed[None, :]            # (F, W)
    is_sin = (k % 2 == 0)[:, None]                           # even channels: sin, odd: cos
    tab_y = np.where(is_sin, np.sin(ang_y), np.cos(ang_y)).astype(np.float32)
    tab_x = np.where(is_sin, np.sin(ang_x), np.cos(ang_x)).astype(np.float32)

    tab_y = jnp.asarray(tab_y.reshape(F, H, 1))   # rows on sublanes, lane dim = 1
    tab_x = jnp.asarray(tab_x.reshape(F, 1, W))   # cols on lanes, sublane dim = 1

    # ---- Tiling --------------------------------------------------------------
    TH = _choose_row_tile(H, W, C, B)
    n_row_tiles = pl.cdiv(H, TH)

    out_block_bytes = C * TH * W * 4
    vmem_limit = None
    if 2 * out_block_bytes > 24 * 1024 * 1024:   # only for very wide feature maps
        vmem_limit = min(2 * out_block_bytes + (8 << 20), 100 << 20)

    pos = pl.pallas_call(
        _pos_embed_sine_kernel,
        out_shape=jax.ShapeDtypeStruct((B, C, H, W), jnp.float32),
        grid=(B, n_row_tiles),
        in_specs=[
            pl.BlockSpec((F, TH, 1), lambda b, h: (0, h, 0)),
            pl.BlockSpec((F, 1, W), lambda b, h: (0, 0, 0)),
        ],
        out_specs=pl.BlockSpec((None, C, TH, W), lambda b, h: (b, 0, h, 0)),
        compiler_params=pltpu.CompilerParams(
            dimension_semantics=("parallel", "parallel"),
            vmem_limit_bytes=vmem_limit),
    )(tab_y, tab_x)

    return pos


def _reference(x, num_pos_feats=64, temperature=10000, normalize=False, scale=None):
    """Plain-numpy reference mirroring the PyTorch forward (mask=None)."""
    if scale is None:
        scale = 2 * math.pi
    B, _, H, W = x.shape
    not_mask = np.ones((B, H, W), dtype=np.float32)
    y_embed = np.cumsum(not_mask, axis=1)
    x_embed = np.cumsum(not_mask, axis=2)
    if normalize:
        eps = 1e-6
        y_embed = y_embed / (y_embed[:, -1:, :] + eps) * scale
        x_embed = x_embed / (x_embed[:, :, -1:] + eps) * scale
    dim_t = np.arange(num_pos_feats, dtype=np.float32)
    dim_t = temperature ** (2 * (dim_t // 2) / num_pos_feats)
    pos_x = x_embed[:, :, :, None] / dim_t
    pos_y = y_embed[:, :, :, None] / dim_t
    pos_x = np.stack((np.sin(pos_x[:, :, :, 0::2]),
                      np.cos(pos_x[:, :, :, 1::2])), axis=4).reshape(B, H, W, -1)
    pos_y = np.stack((np.sin(pos_y[:, :, :, 0::2]),
                      np.cos(pos_y[:, :, :, 1::2])), axis=4).reshape(B, H, W, -1)
    pos = np.concatenate((pos_y, pos_x), axis=3).transpose(0, 3, 1, 2)
    return pos


if __name__ == "__main__":
    key = jax.random.PRNGKey(0)
    # Small NCHW input; only its shape is consumed (mask=None path).
    x = jax.random.normal(key, (2, 4, 16, 16), dtype=jnp.float32)

    # normalize=False (module default)
    pos = position_embedding_sine(x, num_pos_feats=64, temperature=10000,
                                  normalize=False)
    pos = jax.block_until_ready(pos)
    ref = _reference(np.asarray(x), num_pos_feats=64, temperature=10000,
                     normalize=False)
    assert pos.shape == ref.shape == (2, 128, 16, 16)
    np.testing.assert_allclose(np.asarray(pos), ref, rtol=1e-4, atol=1e-4)

    # normalize=True path
    pos_n = position_embedding_sine(x, num_pos_feats=64, temperature=10000,
                                    normalize=True)
    pos_n = jax.block_until_ready(pos_n)
    ref_n = _reference(np.asarray(x), num_pos_feats=64, temperature=10000,
                       normalize=True)
    np.testing.assert_allclose(np.asarray(pos_n), ref_n, rtol=1e-4, atol=1e-4)

    print("KERNEL_OK")
</pallas_src>

<mosaic_0001>
module attributes {stable_mosaic.version = 11 : i64} {
  func.func @_pos_embed_sine_kernel(%arg0: i32, %arg1: i32, %arg2: memref<64x16x1xf32, #tpu.memory_space<vmem>>, %arg3: memref<64x1x16xf32, #tpu.memory_space<vmem>>, %arg4: memref<1x128x16x16xf32, #tpu.memory_space<vmem>>) attributes {dimension_semantics = [#tpu.dimension_semantics<parallel>, #tpu.dimension_semantics<parallel>], iteration_bounds = array<i64: 2, 1>, scalar_prefetch = 0 : i64, scratch_operands = 0 : i64, tpu.core_type = #tpu.core_type<tc>, window_params = [{transform_indices = @transform_0, window_bounds = array<i64: 64, 16, 1>}, {pipeline_mode = #tpu.pipeline_mode<synchronous>, transform_indices = @transform_1, window_bounds = array<i64: 64, 1, 16>}, {transform_indices = @transform_2, window_bounds = array<i64: 1, 128, 16, 16>}]} {
    %c0 = arith.constant 0 : index
    %c0_0 = arith.constant 0 : index
    %c0_1 = arith.constant 0 : index
    %0 = vector.load %arg2[%c0, %c0_0, %c0_1] : memref<64x16x1xf32, #tpu.memory_space<vmem>>, vector<64x16x1xf32>
    %1 = vector.shape_cast %0 : vector<64x16x1xf32> to vector<64x16x1xf32>
    %2 = vector.broadcast %1 : vector<64x16x1xf32> to vector<64x16x16xf32>
    %c0_2 = arith.constant 0 : index
    %c0_3 = arith.constant 0 : index
    %c0_4 = arith.constant 0 : index
    %c0_5 = arith.constant 0 : index
    %3 = vector.load %arg4[%c0_2, %c0_3, %c0_4, %c0_5] : memref<1x128x16x16xf32, #tpu.memory_space<vmem>>, vector<1x64x16x16xf32>
    %4 = vector.shape_cast %3 : vector<1x64x16x16xf32> to vector<64x16x16xf32>
    %5 = vector.shape_cast %2 : vector<64x16x16xf32> to vector<1x64x16x16xf32>
    tpu.vector_store %arg4[%c0_2, %c0_3, %c0_4, %c0_5], %5 {strides = array<i32>} : memref<1x128x16x16xf32, #tpu.memory_space<vmem>>, vector<1x64x16x16xf32>,
    %c0_6 = arith.constant 0 : index
    %c0_7 = arith.constant 0 : index
    %c0_8 = arith.constant 0 : index
    %6 = vector.load %arg3[%c0_6, %c0_7, %c0_8] : memref<64x1x16xf32, #tpu.memory_space<vmem>>, vector<64x1x16xf32>
    %7 = vector.shape_cast %6 : vector<64x1x16xf32> to vector<64x1x16xf32>
    %8 = vector.broadcast %7 : vector<64x1x16xf32> to vector<64x16x16xf32>
    %c0_9 = arith.constant 0 : index
    %c64 = arith.constant 64 : index
    %c0_10 = arith.constant 0 : index
    %c0_11 = arith.constant 0 : index
    %9 = vector.load %arg4[%c0_9, %c64, %c0_10, %c0_11] : memref<1x128x16x16xf32, #tpu.memory_space<vmem>>, vector<1x64x16x16xf32>
    %10 = vector.shape_cast %9 : vector<1x64x16x16xf32> to vector<64x16x16xf32>
    %11 = vector.shape_cast %8 : vector<64x16x16xf32> to vector<1x64x16x16xf32>
    tpu.vector_store %arg4[%c0_9, %c64, %c0_10, %c0_11], %11 {strides = array<i32>} : memref<1x128x16x16xf32, #tpu.memory_space<vmem>>, vector<1x64x16x16xf32>,
    return
  }
  func.func @transform_0(%arg0: i32, %arg1: i32) -> (i32, i32, i32) {
    %c0_i32 = arith.constant 0 : i32
    %c0_i32_0 = arith.constant 0 : i32
    %c0_i32_1 = arith.constant 0 : i32
    return %c0_i32, %arg1, %c0_i32_0 : i32, i32, i32
  }
  func.func @transform_1(%arg0: i32, %arg1: i32) -> (i32, i32, i32) {
    %c0_i32 = arith.constant 0 : i32
    %c0_i32_0 = arith.constant 0 : i32
    %c0_i32_1 = arith.constant 0 : i32
    %c0_i32_2 = arith.constant 0 : i32
    return %c0_i32, %c0_i32_0, %c0_i32_1 : i32, i32, i32
  }
  func.func @transform_2(%arg0: i32, %arg1: i32) -> (i32, i32, i32, i32) {
    %c0_i32 = arith.constant 0 : i32
    %c0_i32_0 = arith.constant 0 : i32
    %c0_i32_1 = arith.constant 0 : i32
    return %arg0, %c0_i32, %arg1, %c0_i32_0 : i32, i32, i32, i32
  }
}

</mosaic_0001>

<llo_original>
// kernel: tpu_custom_call.1
$region0: #{tpu_custom_call.1}
  #allocation0 [shape = 'u32[]', space=smem, size = 0x4, offset = 0x4, fixed_abs, tag = 'smem constant byte address 0x4 - core index']
  #allocation1 [shape = 'u32[144,128]{1,0:T(1,128)}', space=vmem, size = 0x12000, scoped, tag = 'internal scratch']
  %s0 = inlined_call_operand.vmem [shape: f32[64,16,1], index: 0, kind: input, shape index: {}]
  %s1 = inlined_call_operand.vmem [shape: f32[64,1,16], index: 1, kind: input, shape index: {}]
  %s2 = inlined_call_operand.vmem [shape: f32[2,128,16,16], index: 2, kind: output, shape index: {}]
  %s3 = sld [smem:[#allocation0]]
  $region41: #{tpu_custom_call.1} parent=0
    _
  %s5 = ssub.s32 1, %s3
  %s6 = scalar_select 0, %s5, %s3
  loop: start=0, step=1, limit=4
  $region2: #{tpu_custom_call.1} parent=0 // loop_pre_header
    _
  $region3: #{tpu_custom_call.1} parent=0 // loop_header
    %s8 = sphi 0, %s12
    %p9 = scmp.ge.s32.totalorder %s8, 4
    %s15 = sphi 0, %s27
    %s16 = sphi 0, %s23
    %s17 = sphi 0, %s15
    %s18 = sphi 0, %s16
    %s19 = sphi 0, %s17
    %s20 = sphi 0, %s18
    %s30 = sphi 0, %s32
    %s33 = sphi 0, %s30
    %s34 = sphi 0, %s33
    %s50 = sphi 0, %s34
    %s54 = sphi 0, %s54
    %s56 = sphi 0, %s54
    %s57 = sphi 0, %s56
    %s71 = sphi 0, %s57
    %s79 = sphi 0, %s81
    %s82 = sphi 0, %s79
    %s83 = sphi 0, %s82
    %s99 = sphi 0, %s83
  $region4: #{tpu_custom_call.1} parent=0 // loop_header_branch
    %11 = sbr.rel (%p9) target = $region8
  $region5: #{tpu_custom_call.1} parent=0 // loop_body
    %s13 = ssub.s32 %s8, 1
    %s14 = ssub.s32 %s8, 2
    %s21 = sadd.s32 1, %s16
    %p22 = scmp.ge.s32.totalorder %s21, 1
    %s23 = scalar_select %p22, 0, %s21
    %s24 = sadd.s32 1, %s15
    %s25 = scalar_select %p22, %s24, %s15
    %p26 = scmp.ge.s32.totalorder %s25, 2
    %s27 = scalar_select %p26, 0, %s25
    %s28 = ssub.s32 %s16, %s23
    %p29 = scmp.eq.s32.totalorder %s28, 0
    %s31 = sadd.s32 %s30, 1
    %s32 = scalar_select %p29, %s30, %s31
    %p35 = pneg %p29
    %p36 = scmp.eq.s32.totalorder %s8, 1
    %p37 = por %p35, %p36
    %p38 = scmp.ne.s32.totalorder %s30, %s33
    %p39 = scmp.eq.s32.totalorder %s8, 0
    %p40 = por %p38, %p39
    %p41 = scmp.ne.s32.totalorder %s30, %s33
    %p42 = scmp.eq.s32.totalorder %s13, 1
    %p43 = por %p41, %p42
    %p44 = scmp.ne.s32.totalorder %s33, %s34
    %p45 = scmp.eq.s32.totalorder %s13, 0
    %p46 = por %p44, %p45
    %p47 = scmp.ne.s32.totalorder %s33, %s34
    %p48 = scmp.eq.s32.totalorder %s14, 1
    %p49 = por %p47, %p48
    %p51 = scmp.ne.s32.totalorder %s34, %s50
    %p52 = scmp.eq.s32.totalorder %s14, 0
    %p53 = por %p51, %p52
    %s55 = sadd.s32 %s54, 1
    %p58 = scmp.eq.s32.totalorder %s8, 1
    %p59 = scmp.ne.s32.totalorder %s54, %s56
    %p60 = scmp.eq.s32.totalorder %s8, 0
    %p61 = por %p59, %p60
    %p62 = scmp.ne.s32.totalorder %s54, %s56
    %p63 = scmp.eq.s32.totalorder %s13, 1
    %p64 = por %p62, %p63
    %p65 = scmp.ne.s32.totalorder %s56, %s57
    %p66 = scmp.eq.s32.totalorder %s13, 0
    %p67 = por %p65, %p66
    %p68 = scmp.ne.s32.totalorder %s56, %s57
    %p69 = scmp.eq.s32.totalorder %s14, 1
    %p70 = por %p68, %p69
    %p72 = scmp.ne.s32.totalorder %s57, %s71
    %p73 = scmp.eq.s32.totalorder %s14, 0
    %p74 = por %p72, %p73
    %s75 = ssub.s32 %s15, %s27
    %s76 = ssub.s32 %s16, %s23
    %s77 = sor.u32 %s75, %s76
    %p78 = scmp.eq.s32.totalorder %s77, 0
    %s80 = sadd.s32 %s79, 1
    %s81 = scalar_select %p78, %s79, %s80
    %p84 = pneg %p78
    %p85 = scmp.eq.s32.totalorder %s8, 1
    %p86 = por %p84, %p85
    %p87 = scmp.ne.s32.totalorder %s79, %s82
    %p88 = scmp.eq.s32.totalorder %s8, 0
    %p89 = por %p87, %p88
    %p90 = scmp.ne.s32.totalorder %s79, %s82
    %p91 = scmp.eq.s32.totalorder %s13, 1
    %p92 = por %p90, %p91
    %p93 = scmp.ne.s32.totalorder %s82, %s83
    %p94 = scmp.eq.s32.totalorder %s13, 0
    %p95 = por %p93, %p94
    %p96 = scmp.ne.s32.totalorder %s82, %s83
    %p97 = scmp.eq.s32.totalorder %s14, 1
    %p98 = por %p96, %p97
    %p100 = scmp.ne.s32.totalorder %s83, %s99
    %p101 = scmp.eq.s32.totalorder %s14, 0
    %p102 = por %p100, %p101
    %p103 = scmp.le.s32.totalorder 1, %s8
    %p104 = scmp.lt.s32.totalorder %s8, 3
    %p105 = pnand %p103, %p104
    %p106 = pneg %p105
    // Predicated region
    $region9: #{tpu_custom_call.1} parent=5 // pred_check
      _
    $region10: #{tpu_custom_call.1} parent=5 // pred_check_branch
      %108 = sbr.rel (%p105) target = $region12
    $region11: #{tpu_custom_call.1} parent=5 // pred_region
      %s109 = ssub.s32 %s8, 1
      // Predicated region
      $region13: #{tpu_custom_call.1} parent=11 // pred_check
        %p110 = pneg %p46
      $region14: #{tpu_custom_call.1} parent=11 // pred_check_branch
        %112 = sbr.rel (%p110) target = $region16
      $region15: #{tpu_custom_call.1} parent=11 // pred_region
        %s113 = smul.u32 2, %s18
        %p114 = scmp.lt.s32.totalorder %s113, 1
        %s115 = scalar_select %p114, %s113, 1
        %s116 = smul.addr %s115, 8
        %s117 = scalar_lea.vmem %s0, %s116
        %s118 = smul.u32 2, %s18
      $region16: #{tpu_custom_call.1} parent=11 // pred_fallthru
        _
      // Predicated region
      $region17: #{tpu_custom_call.1} parent=11 // pred_check
        %p119 = pneg %p67
      $region18: #{tpu_custom_call.1} parent=11 // pred_check_branch
        %121 = sbr.rel (%p119) target = $region20
      $region19: #{tpu_custom_call.1} parent=11 // pred_region
        _
      $region20: #{tpu_custom_call.1} parent=11 // pred_fallthru
        _
    $region12: #{tpu_custom_call.1} parent=5 // pred_fallthru
      _
    %p122 = scmp.lt.s32.totalorder %s8, 2
    // Predicated region
    $region21: #{tpu_custom_call.1} parent=5 // pred_check
      %p123 = pneg %p122
    $region22: #{tpu_custom_call.1} parent=5 // pred_check_branch
      %125 = sbr.rel (%p123) target = $region24
    $region23: #{tpu_custom_call.1} parent=5 // pred_region
      _
    $region24: #{tpu_custom_call.1} parent=5 // pred_fallthru
      _
    %p126 = scmp.le.s32.totalorder 1, %s8
    %p127 = scmp.lt.s32.totalorder %s8, 3
    %p128 = pnand %p126, %p127
    %p129 = pneg %p128
    // Predicated region
    $region25: #{tpu_custom_call.1} parent=5 // pred_check
      _
    $region26: #{tpu_custom_call.1} parent=5 // pred_check_branch
      %131 = sbr.rel (%p128) target = $region28
    $region27: #{tpu_custom_call.1} parent=5 // pred_region
      %s132 = ssub.s32 %s8, 1
      %s133 = smul.u32 2, %s18
      %p134 = scmp.lt.s32.totalorder %s133, 1
      %s135 = scalar_select %p134, %s133, 1
      %s136 = smul.addr %s135, 8
      %s137 = scalar_lea.vmem %s0, %s136
      %p138 = pneg %p46
      %p139 = pneg %p43
      %p140 = pneg %p67
      %p141 = pneg %p64
      %p142 = pneg %p95
      %p143 = pneg %p92
      %s144 = smul.u32 2, %s18
      %p145 = scmp.lt.s32.totalorder %s17, 1
      %s146 = scalar_select %p145, %s17, 1
      %p147 = scmp.lt.s32.totalorder %s144, 1
      %s148 = scalar_select %p147, %s144, 1
      %s149 = smul.addr %s146, 256
      %s150 = sadd.s32 %s148, %s149
      %s151 = smul.addr %s150, 8
      %s152 = scalar_lea.vmem %s2, %s151
      %s153 = smul.u32 2, %s18
      %p154 = scmp.lt.s32.totalorder %s153, 1
      %s155 = scalar_select %p154, %s153, 1
      %s156 = smul.addr %s155, 8
      %s157 = scalar_lea.vmem %s0, %s156
      %s158 = smul.u32 2, %s18
      %s159 = smul.u32 2, %s18
      %p160 = scmp.lt.s32.totalorder %s17, 1
      %s161 = scalar_select %p160, %s17, 1
      %p162 = scmp.lt.s32.totalorder %s159, 1
      %s163 = scalar_select %p162, %s159, 1
      %s164 = smul.addr %s161, 256
      %s165 = sadd.s32 %s163, %s164
      %s166 = smul.addr %s165, 8
      %s167 = scalar_lea.vmem %s2, %s166
      %s168 = smul.u32 2, %s18
      %v169 = vld [vmem:[%s157] sm:$0xff]
      %v170 = vld [vmem:[%s157 + $0x8] sm:$0xff]
      %v171 = vld [vmem:[%s157 + $0x10] sm:$0xff]
      %v172 = vld [vmem:[%s157 + $0x18] sm:$0xff]
      %v173 = vld [vmem:[%s157 + $0x20] sm:$0xff]
      %v174 = vld [vmem:[%s157 + $0x28] sm:$0xff]
      %v175 = vld [vmem:[%s157 + $0x30] sm:$0xff]
      %v176 = vld [vmem:[%s157 + $0x38] sm:$0xff]
      %v177 = vld [vmem:[%s157 + $0x40] sm:$0xff]
      %v178 = vld [vmem:[%s157 + $0x48] sm:$0xff]
      %v179 = vld [vmem:[%s157 + $0x50] sm:$0xff]
      %v180 = vld [vmem:[%s157 + $0x58] sm:$0xff]
      %v181 = vld [vmem:[%s157 + $0x60] sm:$0xff]
      %v182 = vld [vmem:[%s157 + $0x68] sm:$0xff]
      %v183 = vld [vmem:[%s157 + $0x70] sm:$0xff]
      %v184 = vld [vmem:[%s157 + $0x78] sm:$0xff]
      %v185 = vld [vmem:[%s157 + $0x80] sm:$0xff]
      %v186 = vld [vmem:[%s157 + $0x88] sm:$0xff]
      %v187 = vld [vmem:[%s157 + $0x90] sm:$0xff]
      %v188 = vld [vmem:[%s157 + $0x98] sm:$0xff]
      %v189 = vld [vmem:[%s157 + $0xa0] sm:$0xff]
      %v190 = vld [vmem:[%s157 + $0xa8] sm:$0xff]
      %v191 = vld [vmem:[%s157 + $0xb0] sm:$0xff]
      %v192 = vld [vmem:[%s157 + $0xb8] sm:$0xff]
      %v193 = vld [vmem:[%s157 + $0xc0] sm:$0xff]
      %v194 = vld [vmem:[%s157 + $0xc8] sm:$0xff]
      %v195 = vld [vmem:[%s157 + $0xd0] sm:$0xff]
      %v196 = vld [vmem:[%s157 + $0xd8] sm:$0xff]
      %v197 = vld [vmem:[%s157 + $0xe0] sm:$0xff]
      %v198 = vld [vmem:[%s157 + $0xe8] sm:$0xff]
      %v199 = vld [vmem:[%s157 + $0xf0] sm:$0xff]
      %v200 = vld [vmem:[%s157 + $0xf8] sm:$0xff]
      %v201 = vld [vmem:[%s157 + $0x100] sm:$0xff]
      %v202 = vld [vmem:[%s157 + $0x108] sm:$0xff]
      %v203 = vld [vmem:[%s157 + $0x110] sm:$0xff]
      %v204 = vld [vmem:[%s157 + $0x118] sm:$0xff]
      %v205 = vld [vmem:[%s157 + $0x120] sm:$0xff]
      %v206 = vld [vmem:[%s157 + $0x128] sm:$0xff]
      %v207 = vld [vmem:[%s157 + $0x130] sm:$0xff]
      %v208 = vld [vmem:[%s157 + $0x138] sm:$0xff]
      %v209 = vld [vmem:[%s157 + $0x140] sm:$0xff]
      %v210 = vld [vmem:[%s157 + $0x148] sm:$0xff]
      %v211 = vld [vmem:[%s157 + $0x150] sm:$0xff]
      %v212 = vld [vmem:[%s157 + $0x158] sm:$0xff]
      %v213 = vld [vmem:[%s157 + $0x160] sm:$0xff]
      %v214 = vld [vmem:[%s157 + $0x168] sm:$0xff]
      %v215 = vld [vmem:[%s157 + $0x170] sm:$0xff]
      %v216 = vld [vmem:[%s157 + $0x178] sm:$0xff]
      %v217 = vld [vmem:[%s157 + $0x180] sm:$0xff]
      %v218 = vld [vmem:[%s157 + $0x188] sm:$0xff]
      %v219 = vld [vmem:[%s157 + $0x190] sm:$0xff]
      %v220 = vld [vmem:[%s157 + $0x198] sm:$0xff]
      %v221 = vld [vmem:[%s157 + $0x1a0] sm:$0xff]
      %v222 = vld [vmem:[%s157 + $0x1a8] sm:$0xff]
      %v223 = vld [vmem:[%s157 + $0x1b0] sm:$0xff]
      %v224 = vld [vmem:[%s157 + $0x1b8] sm:$0xff]
      %v225 = vld [vmem:[%s157 + $0x1c0] sm:$0xff]
      %v226 = vld [vmem:[%s157 + $0x1c8] sm:$0xff]
      %v227 = vld [vmem:[%s157 + $0x1d0] sm:$0xff]
      %v228 = vld [vmem:[%s157 + $0x1d8] sm:$0xff]
      %v229 = vld [vmem:[%s157 + $0x1e0] sm:$0xff]
      %v230 = vld [vmem:[%s157 + $0x1e8] sm:$0xff]
      %v231 = vld [vmem:[%s157 + $0x1f0] sm:$0xff]
      %v232 = vld [vmem:[%s157 + $0x1f8] sm:$0xff]
      %v233 = vld [vmem:[%s157 + $0x200] sm:$0xff]
      %v234 = vld [vmem:[%s157 + $0x208] sm:$0xff]
      %v235 = vld [vmem:[%s157 + $0x210] sm:$0xff]
      %v236 = vld [vmem:[%s157 + $0x218] sm:$0xff]
      %v237 = vld [vmem:[%s157 + $0x220] sm:$0xff]
      %v238 = vld [vmem:[%s157 + $0x228] sm:$0xff]
      %v239 = vld [vmem:[%s157 + $0x230] sm:$0xff]
      %v240 = vld [vmem:[%s157 + $0x238] sm:$0xff]
      %v241 = vld [vmem:[%s157 + $0x240] sm:$0xff]
      %v242 = vld [vmem:[%s157 + $0x248] sm:$0xff]
      %v243 = vld [vmem:[%s157 + $0x250] sm:$0xff]
      %v244 = vld [vmem:[%s157 + $0x258] sm:$0xff]
      %v245 = vld [vmem:[%s157 + $0x260] sm:$0xff]
      %v246 = vld [vmem:[%s157 + $0x268] sm:$0xff]
      %v247 = vld [vmem:[%s157 + $0x270] sm:$0xff]
      %v248 = vld [vmem:[%s157 + $0x278] sm:$0xff]
      %v249 = vld [vmem:[%s157 + $0x280] sm:$0xff]
      %v250 = vld [vmem:[%s157 + $0x288] sm:$0xff]
      %v251 = vld [vmem:[%s157 + $0x290] sm:$0xff]
      %v252 = vld [vmem:[%s157 + $0x298] sm:$0xff]
      %v253 = vld [vmem:[%s157 + $0x2a0] sm:$0xff]
      %v254 = vld [vmem:[%s157 + $0x2a8] sm:$0xff]
      %v255 = vld [vmem:[%s157 + $0x2b0] sm:$0xff]
      %v256 = vld [vmem:[%s157 + $0x2b8] sm:$0xff]
      %v257 = vld [vmem:[%s157 + $0x2c0] sm:$0xff]
      %v258 = vld [vmem:[%s157 + $0x2c8] sm:$0xff]
      %v259 = vld [vmem:[%s157 + $0x2d0] sm:$0xff]
      %v260 = vld [vmem:[%s157 + $0x2d8] sm:$0xff]
      %v261 = vld [vmem:[%s157 + $0x2e0] sm:$0xff]
      %v262 = vld [vmem:[%s157 + $0x2e8] sm:$0xff]
      %v263 = vld [vmem:[%s157 + $0x2f0] sm:$0xff]
      %v264 = vld [vmem:[%s157 + $0x2f8] sm:$0xff]
      %v265 = vld [vmem:[%s157 + $0x300] sm:$0xff]
      %v266 = vld [vmem:[%s157 + $0x308] sm:$0xff]
      %v267 = vld [vmem:[%s157 + $0x310] sm:$0xff]
      %v268 = vld [vmem:[%s157 + $0x318] sm:$0xff]
      %v269 = vld [vmem:[%s157 + $0x320] sm:$0xff]
      %v270 = vld [vmem:[%s157 + $0x328] sm:$0xff]
      %v271 = vld [vmem:[%s157 + $0x330] sm:$0xff]
      %v272 = vld [vmem:[%s157 + $0x338] sm:$0xff]
      %v273 = vld [vmem:[%s157 + $0x340] sm:$0xff]
      %v274 = vld [vmem:[%s157 + $0x348] sm:$0xff]
      %v275 = vld [vmem:[%s157 + $0x350] sm:$0xff]
      %v276 = vld [vmem:[%s157 + $0x358] sm:$0xff]
      %v277 = vld [vmem:[%s157 + $0x360] sm:$0xff]
      %v278 = vld [vmem:[%s157 + $0x368] sm:$0xff]
      %v279 = vld [vmem:[%s157 + $0x370] sm:$0xff]
      %v280 = vld [vmem:[%s157 + $0x378] sm:$0xff]
      %v281 = vld [vmem:[%s157 + $0x380] sm:$0xff]
      %v282 = vld [vmem:[%s157 + $0x388] sm:$0xff]
      %v283 = vld [vmem:[%s157 + $0x390] sm:$0xff]
      %v284 = vld [vmem:[%s157 + $0x398] sm:$0xff]
      %v285 = vld [vmem:[%s157 + $0x3a0] sm:$0xff]
      %v286 = vld [vmem:[%s157 + $0x3a8] sm:$0xff]
      %v287 = vld [vmem:[%s157 + $0x3b0] sm:$0xff]
      %v288 = vld [vmem:[%s157 + $0x3b8] sm:$0xff]
      %v289 = vld [vmem:[%s157 + $0x3c0] sm:$0xff]
      %v290 = vld [vmem:[%s157 + $0x3c8] sm:$0xff]
      %v291 = vld [vmem:[%s157 + $0x3d0] sm:$0xff]
      %v292 = vld [vmem:[%s157 + $0x3d8] sm:$0xff]
      %v293 = vld [vmem:[%s157 + $0x3e0] sm:$0xff]
      %v294 = vld [vmem:[%s157 + $0x3e8] sm:$0xff]
      %v295 = vld [vmem:[%s157 + $0x3f0] sm:$0xff]
      %v296 = vld [vmem:[%s157 + $0x3f8] sm:$0xff]
      %298 = vset.pattern.permute.xlu0 0
      %299 = vperm.xlu0 %298, %v169
      %v300 = vpop.permute.xlu0 %299
      %303 = vset.pattern.permute.xlu0 0
      %304 = vperm.xlu0 %303, %v170
      %v305 = vpop.permute.xlu0 %304
      %308 = vset.pattern.permute.xlu0 0
      %309 = vperm.xlu0 %308, %v171
      %v310 = vpop.permute.xlu0 %309
      %313 = vset.pattern.permute.xlu0 0
      %314 = vperm.xlu0 %313, %v172
      %v315 = vpop.permute.xlu0 %314
      %318 = vset.pattern.permute.xlu0 0
      %319 = vperm.xlu0 %318, %v173
      %v320 = vpop.permute.xlu0 %319
      %323 = vset.pattern.permute.xlu0 0
      %324 = vperm.xlu0 %323, %v174
      %v325 = vpop.permute.xlu0 %324
      %328 = vset.pattern.permute.xlu0 0
      %329 = vperm.xlu0 %328, %v175
      %v330 = vpop.permute.xlu0 %329
      %333 = vset.pattern.permute.xlu0 0
      %334 = vperm.xlu0 %333, %v176
      %v335 = vpop.permute.xlu0 %334
      %338 = vset.pattern.permute.xlu0 0
      %339 = vperm.xlu0 %338, %v177
      %v340 = vpop.permute.xlu0 %339
      %343 = vset.pattern.permute.xlu0 0
      %344 = vperm.xlu0 %343, %v178
      %v345 = vpop.permute.xlu0 %344
      %348 = vset.pattern.permute.xlu0 0
      %349 = vperm.xlu0 %348, %v179
      %v350 = vpop.permute.xlu0 %349
      %353 = vset.pattern.permute.xlu0 0
      %354 = vperm.xlu0 %353, %v180
      %v355 = vpop.permute.xlu0 %354
      %358 = vset.pattern.permute.xlu0 0
      %359 = vperm.xlu0 %358, %v181
      %v360 = vpop.permute.xlu0 %359
      %363 = vset.pattern.permute.xlu0 0
      %364 = vperm.xlu0 %363, %v182
      %v365 = vpop.permute.xlu0 %364
      %368 = vset.pattern.permute.xlu0 0
      %369 = vperm.xlu0 %368, %v183
      %v370 = vpop.permute.xlu0 %369
      %373 = vset.pattern.permute.xlu0 0
      %374 = vperm.xlu0 %373, %v184
      %v375 = vpop.permute.xlu0 %374
      %378 = vset.pattern.permute.xlu0 0
      %379 = vperm.xlu0 %378, %v185
      %v380 = vpop.permute.xlu0 %379
      %383 = vset.pattern.permute.xlu0 0
      %384 = vperm.xlu0 %383, %v186
      %v385 = vpop.permute.xlu0 %384
      %388 = vset.pattern.permute.xlu0 0
      %389 = vperm.xlu0 %388, %v187
      %v390 = vpop.permute.xlu0 %389
      %393 = vset.pattern.permute.xlu0 0
      %394 = vperm.xlu0 %393, %v188
      %v395 = vpop.permute.xlu0 %394
      %398 = vset.pattern.permute.xlu0 0
      %399 = vperm.xlu0 %398, %v189
      %v400 = vpop.permute.xlu0 %399
      %403 = vset.pattern.permute.xlu0 0
      %404 = vperm.xlu0 %403, %v190
      %v405 = vpop.permute.xlu0 %404
      %408 = vset.pattern.permute.xlu0 0
      %409 = vperm.xlu0 %408, %v191
      %v410 = vpop.permute.xlu0 %409
      %413 = vset.pattern.permute.xlu0 0
      %414 = vperm.xlu0 %413, %v192
      %v415 = vpop.permute.xlu0 %414
      %418 = vset.pattern.permute.xlu0 0
      %419 = vperm.xlu0 %418, %v193
      %v420 = vpop.permute.xlu0 %419
      %423 = vset.pattern.permute.xlu0 0
      %424 = vperm.xlu0 %423, %v194
      %v425 = vpop.permute.xlu0 %424
      %428 = vset.pattern.permute.xlu0 0
      %429 = vperm.xlu0 %428, %v195
      %v430 = vpop.permute.xlu0 %429
      %433 = vset.pattern.permute.xlu0 0
      %434 = vperm.xlu0 %433, %v196
      %v435 = vpop.permute.xlu0 %434
      %438 = vset.pattern.permute.xlu0 0
      %439 = vperm.xlu0 %438, %v197
      %v440 = vpop.permute.xlu0 %439
      %443 = vset.pattern.permute.xlu0 0
      %444 = vperm.xlu0 %443, %v198
      %v445 = vpop.permute.xlu0 %444
      %448 = vset.pattern.permute.xlu0 0
      %449 = vperm.xlu0 %448, %v199
      %v450 = vpop.permute.xlu0 %449
      %453 = vset.pattern.permute.xlu0 0
      %454 = vperm.xlu0 %453, %v200
      %v455 = vpop.permute.xlu0 %454
      %458 = vset.pattern.permute.xlu0 0
      %459 = vperm.xlu0 %458, %v201
      %v460 = vpop.permute.xlu0 %459
      %463 = vset.pattern.permute.xlu0 0
      %464 = vperm.xlu0 %463, %v202
      %v465 = vpop.permute.xlu0 %464
      %468 = vset.pattern.permute.xlu0 0
      %469 = vperm.xlu0 %468, %v203
      %v470 = vpop.permute.xlu0 %469
      %473 = vset.pattern.permute.xlu0 0
      %474 = vperm.xlu0 %473, %v204
      %v475 = vpop.permute.xlu0 %474
      %478 = vset.pattern.permute.xlu0 0
      %479 = vperm.xlu0 %478, %v205
      %v480 = vpop.permute.xlu0 %479
      %483 = vset.pattern.permute.xlu0 0
      %484 = vperm.xlu0 %483, %v206
      %v485 = vpop.permute.xlu0 %484
      %488 = vset.pattern.permute.xlu0 0
      %489 = vperm.xlu0 %488, %v207
      %v490 = vpop.permute.xlu0 %489
      %493 = vset.pattern.permute.xlu0 0
      %494 = vperm.xlu0 %493, %v208
      %v495 = vpop.permute.xlu0 %494
      %498 = vset.pattern.permute.xlu0 0
      %499 = vperm.xlu0 %498, %v209
      %v500 = vpop.permute.xlu0 %499
      %503 = vset.pattern.permute.xlu0 0
      %504 = vperm.xlu0 %503, %v210
      %v505 = vpop.permute.xlu0 %504
      %508 = vset.pattern.permute.xlu0 0
      %509 = vperm.xlu0 %508, %v211
      %v510 = vpop.permute.xlu0 %509
      %513 = vset.pattern.permute.xlu0 0
      %514 = vperm.xlu0 %513, %v212
      %v515 = vpop.permute.xlu0 %514
      %518 = vset.pattern.permute.xlu0 0
      %519 = vperm.xlu0 %518, %v213
      %v520 = vpop.permute.xlu0 %519
      %523 = vset.pattern.permute.xlu0 0
      %524 = vperm.xlu0 %523, %v214
      %v525 = vpop.permute.xlu0 %524
      %528 = vset.pattern.permute.xlu0 0
      %529 = vperm.xlu0 %528, %v215
      %v530 = vpop.permute.xlu0 %529
      %533 = vset.pattern.permute.xlu0 0
      %534 = vperm.xlu0 %533, %v216
      %v535 = vpop.permute.xlu0 %534
      %538 = vset.pattern.permute.xlu0 0
      %539 = vperm.xlu0 %538, %v217
      %v540 = vpop.permute.xlu0 %539
      %543 = vset.pattern.permute.xlu0 0
      %544 = vperm.xlu0 %543, %v218
      %v545 = vpop.permute.xlu0 %544
      %548 = vset.pattern.permute.xlu0 0
      %549 = vperm.xlu0 %548, %v219
      %v550 = vpop.permute.xlu0 %549
      %553 = vset.pattern.permute.xlu0 0
      %554 = vperm.xlu0 %553, %v220
      %v555 = vpop.permute.xlu0 %554
      %558 = vset.pattern.permute.xlu0 0
      %559 = vperm.xlu0 %558, %v221
      %v560 = vpop.permute.xlu0 %559
      %563 = vset.pattern.permute.xlu0 0
      %564 = vperm.xlu0 %563, %v222
      %v565 = vpop.permute.xlu0 %564
      %568 = vset.pattern.permute.xlu0 0
      %569 = vperm.xlu0 %568, %v223
      %v570 = vpop.permute.xlu0 %569
      %573 = vset.pattern.permute.xlu0 0
      %574 = vperm.xlu0 %573, %v224
      %v575 = vpop.permute.xlu0 %574
      %578 = vset.pattern.permute.xlu0 0
      %579 = vperm.xlu0 %578, %v225
      %v580 = vpop.permute.xlu0 %579
      %583 = vset.pattern.permute.xlu0 0
      %584 = vperm.xlu0 %583, %v226
      %v585 = vpop.permute.xlu0 %584
      %588 = vset.pattern.permute.xlu0 0
      %589 = vperm.xlu0 %588, %v227
      %v590 = vpop.permute.xlu0 %589
      %593 = vset.pattern.permute.xlu0 0
      %594 = vperm.xlu0 %593, %v228
      %v595 = vpop.permute.xlu0 %594
      %598 = vset.pattern.permute.xlu0 0
      %599 = vperm.xlu0 %598, %v229
      %v600 = vpop.permute.xlu0 %599
      %603 = vset.pattern.permute.xlu0 0
      %604 = vperm.xlu0 %603, %v230
      %v605 = vpop.permute.xlu0 %604
      %608 = vset.pattern.permute.xlu0 0
      %609 = vperm.xlu0 %608, %v231
      %v610 = vpop.permute.xlu0 %609
      %613 = vset.pattern.permute.xlu0 0
      %614 = vperm.xlu0 %613, %v232
      %v615 = vpop.permute.xlu0 %614
      %618 = vset.pattern.permute.xlu0 0
      %619 = vperm.xlu0 %618, %v233
      %v620 = vpop.permute.xlu0 %619
      %623 = vset.pattern.permute.xlu0 0
      %624 = vperm.xlu0 %623, %v234
      %v625 = vpop.permute.xlu0 %624
      %628 = vset.pattern.permute.xlu0 0
      %629 = vperm.xlu0 %628, %v235
      %v630 = vpop.permute.xlu0 %629
      %633 = vset.pattern.permute.xlu0 0
      %634 = vperm.xlu0 %633, %v236
      %v635 = vpop.permute.xlu0 %634
      %638 = vset.pattern.permute.xlu0 0
      %639 = vperm.xlu0 %638, %v237
      %v640 = vpop.permute.xlu0 %639
      %643 = vset.pattern.permute.xlu0 0
      %644 = vperm.xlu0 %643, %v238
      %v645 = vpop.permute.xlu0 %644
      %648 = vset.pattern.permute.xlu0 0
      %649 = vperm.xlu0 %648, %v239
      %v650 = vpop.permute.xlu0 %649
      %653 = vset.pattern.permute.xlu0 0
      %654 = vperm.xlu0 %653, %v240
      %v655 = vpop.permute.xlu0 %654
      %658 = vset.pattern.permute.xlu0 0
      %659 = vperm.xlu0 %658, %v241
      %v660 = vpop.permute.xlu0 %659
      %663 = vset.pattern.permute.xlu0 0
      %664 = vperm.xlu0 %663, %v242
      %v665 = vpop.permute.xlu0 %664
      %668 = vset.pattern.permute.xlu0 0
      %669 = vperm.xlu0 %668, %v243
      %v670 = vpop.permute.xlu0 %669
      %673 = vset.pattern.permute.xlu0 0
      %674 = vperm.xlu0 %673, %v244
      %v675 = vpop.permute.xlu0 %674
      %678 = vset.pattern.permute.xlu0 0
      %679 = vperm.xlu0 %678, %v245
      %v680 = vpop.permute.xlu0 %679
      %683 = vset.pattern.permute.xlu0 0
      %684 = vperm.xlu0 %683, %v246
      %v685 = vpop.permute.xlu0 %684
      %688 = vset.pattern.permute.xlu0 0
      %689 = vperm.xlu0 %688, %v247
      %v690 = vpop.permute.xlu0 %689
      %693 = vset.pattern.permute.xlu0 0
      %694 = vperm.xlu0 %693, %v248
      %v695 = vpop.permute.xlu0 %694
      %698 = vset.pattern.permute.xlu0 0
      %699 = vperm.xlu0 %698, %v249
      %v700 = vpop.permute.xlu0 %699
      %703 = vset.pattern.permute.xlu0 0
      %704 = vperm.xlu0 %703, %v250
      %v705 = vpop.permute.xlu0 %704
      %708 = vset.pattern.permute.xlu0 0
      %709 = vperm.xlu0 %708, %v251
      %v710 = vpop.permute.xlu0 %709
      %713 = vset.pattern.permute.xlu0 0
      %714 = vperm.xlu0 %713, %v252
      %v715 = vpop.permute.xlu0 %714
      %718 = vset.pattern.permute.xlu0 0
      %719 = vperm.xlu0 %718, %v253
      %v720 = vpop.permute.xlu0 %719
      %723 = vset.pattern.permute.xlu0 0
      %724 = vperm.xlu0 %723, %v254
      %v725 = vpop.permute.xlu0 %724
      %728 = vset.pattern.permute.xlu0 0
      %729 = vperm.xlu0 %728, %v255
      %v730 = vpop.permute.xlu0 %729
      %733 = vset.pattern.permute.xlu0 0
      %734 = vperm.xlu0 %733, %v256
      %v735 = vpop.permute.xlu0 %734
      %738 = vset.pattern.permute.xlu0 0
      %739 = vperm.xlu0 %738, %v257
      %v740 = vpop.permute.xlu0 %739
      %743 = vset.pattern.permute.xlu0 0
      %744 = vperm.xlu0 %743, %v258
      %v745 = vpop.permute.xlu0 %744
      %748 = vset.pattern.permute.xlu0 0
      %749 = vperm.xlu0 %748, %v259
      %v750 = vpop.permute.xlu0 %749
      %753 = vset.pattern.permute.xlu0 0
      %754 = vperm.xlu0 %753, %v260
      %v755 = vpop.permute.xlu0 %754
      %758 = vset.pattern.permute.xlu0 0
      %759 = vperm.xlu0 %758, %v261
      %v760 = vpop.permute.xlu0 %759
      %763 = vset.pattern.permute.xlu0 0
      %764 = vperm.xlu0 %763, %v262
      %v765 = vpop.permute.xlu0 %764
      %768 = vset.pattern.permute.xlu0 0
      %769 = vperm.xlu0 %768, %v263
      %v770 = vpop.permute.xlu0 %769
      %773 = vset.pattern.permute.xlu0 0
      %774 = vperm.xlu0 %773, %v264
      %v775 = vpop.permute.xlu0 %774
      %778 = vset.pattern.permute.xlu0 0
      %779 = vperm.xlu0 %778, %v265
      %v780 = vpop.permute.xlu0 %779
      %783 = vset.pattern.permute.xlu0 0
      %784 = vperm.xlu0 %783, %v266
      %v785 = vpop.permute.xlu0 %784
      %788 = vset.pattern.permute.xlu0 0
      %789 = vperm.xlu0 %788, %v267
      %v790 = vpop.permute.xlu0 %789
      %793 = vset.pattern.permute.xlu0 0
      %794 = vperm.xlu0 %793, %v268
      %v795 = vpop.permute.xlu0 %794
      %798 = vset.pattern.permute.xlu0 0
      %799 = vperm.xlu0 %798, %v269
      %v800 = vpop.permute.xlu0 %799
      %803 = vset.pattern.permute.xlu0 0
      %804 = vperm.xlu0 %803, %v270
      %v805 = vpop.permute.xlu0 %804
      %808 = vset.pattern.permute.xlu0 0
      %809 = vperm.xlu0 %808, %v271
      %v810 = vpop.permute.xlu0 %809
      %813 = vset.pattern.permute.xlu0 0
      %814 = vperm.xlu0 %813, %v272
      %v815 = vpop.permute.xlu0 %814
      %818 = vset.pattern.permute.xlu0 0
      %819 = vperm.xlu0 %818, %v273
      %v820 = vpop.permute.xlu0 %819
      %823 = vset.pattern.permute.xlu0 0
      %824 = vperm.xlu0 %823, %v274
      %v825 = vpop.permute.xlu0 %824
      %828 = vset.pattern.permute.xlu0 0
      %829 = vperm.xlu0 %828, %v275
      %v830 = vpop.permute.xlu0 %829
      %833 = vset.pattern.permute.xlu0 0
      %834 = vperm.xlu0 %833, %v276
      %v835 = vpop.permute.xlu0 %834
      %838 = vset.pattern.permute.xlu0 0
      %839 = vperm.xlu0 %838, %v277
      %v840 = vpop.permute.xlu0 %839
      %843 = vset.pattern.permute.xlu0 0
      %844 = vperm.xlu0 %843, %v278
      %v845 = vpop.permute.xlu0 %844
      %848 = vset.pattern.permute.xlu0 0
      %849 = vperm.xlu0 %848, %v279
      %v850 = vpop.permute.xlu0 %849
      %853 = vset.pattern.permute.xlu0 0
      %854 = vperm.xlu0 %853, %v280
      %v855 = vpop.permute.xlu0 %854
      %858 = vset.pattern.permute.xlu0 0
      %859 = vperm.xlu0 %858, %v281
      %v860 = vpop.permute.xlu0 %859
      %863 = vset.pattern.permute.xlu0 0
      %864 = vperm.xlu0 %863, %v282
      %v865 = vpop.permute.xlu0 %864
      %868 = vset.pattern.permute.xlu0 0
      %869 = vperm.xlu0 %868, %v283
      %v870 = vpop.permute.xlu0 %869
      %873 = vset.pattern.permute.xlu0 0
      %874 = vperm.xlu0 %873, %v284
      %v875 = vpop.permute.xlu0 %874
      %878 = vset.pattern.permute.xlu0 0
      %879 = vperm.xlu0 %878, %v285
      %v880 = vpop.permute.xlu0 %879
      %883 = vset.pattern.permute.xlu0 0
      %884 = vperm.xlu0 %883, %v286
      %v885 = vpop.permute.xlu0 %884
      %888 = vset.pattern.permute.xlu0 0
      %889 = vperm.xlu0 %888, %v287
      %v890 = vpop.permute.xlu0 %889
      %893 = vset.pattern.permute.xlu0 0
      %894 = vperm.xlu0 %893, %v288
      %v895 = vpop.permute.xlu0 %894
      %898 = vset.pattern.permute.xlu0 0
      %899 = vperm.xlu0 %898, %v289
      %v900 = vpop.permute.xlu0 %899
      %903 = vset.pattern.permute.xlu0 0
      %904 = vperm.xlu0 %903, %v290
      %v905 = vpop.permute.xlu0 %904
      %908 = vset.pattern.permute.xlu0 0
      %909 = vperm.xlu0 %908, %v291
      %v910 = vpop.permute.xlu0 %909
      %913 = vset.pattern.permute.xlu0 0
      %914 = vperm.xlu0 %913, %v292
      %v915 = vpop.permute.xlu0 %914
      %918 = vset.pattern.permute.xlu0 0
      %919 = vperm.xlu0 %918, %v293
      %v920 = vpop.permute.xlu0 %919
      %923 = vset.pattern.permute.xlu0 0
      %924 = vperm.xlu0 %923, %v294
      %v925 = vpop.permute.xlu0 %924
      %928 = vset.pattern.permute.xlu0 0
      %929 = vperm.xlu0 %928, %v295
      %v930 = vpop.permute.xlu0 %929
      %933 = vset.pattern.permute.xlu0 0
      %934 = vperm.xlu0 %933, %v296
      %v935 = vpop.permute.xlu0 %934
      %vm937 = vcmask 130048
      %938 = vst.msk [vmem:[%s167] sm:$0xff] %vm937, %v300
      %939 = vst.msk [vmem:[%s167 + $0x8] sm:$0xff] %vm937, %v305
      %940 = vst.msk [vmem:[%s167 + $0x10] sm:$0xff] %vm937, %v310
      %941 = vst.msk [vmem:[%s167 + $0x18] sm:$0xff] %vm937, %v315
      %942 = vst.msk [vmem:[%s167 + $0x20] sm:$0xff] %vm937, %v320
      %943 = vst.msk [vmem:[%s167 + $0x28] sm:$0xff] %vm937, %v325
      %944 = vst.msk [vmem:[%s167 + $0x30] sm:$0xff] %vm937, %v330
      %945 = vst.msk [vmem:[%s167 + $0x38] sm:$0xff] %vm937, %v335
      %946 = vst.msk [vmem:[%s167 + $0x40] sm:$0xff] %vm937, %v340
      %947 = vst.msk [vmem:[%s167 + $0x48] sm:$0xff] %vm937, %v345
      %948 = vst.msk [vmem:[%s167 + $0x50] sm:$0xff] %vm937, %v350
      %949 = vst.msk [vmem:[%s167 + $0x58] sm:$0xff] %vm937, %v355
      %950 = vst.msk [vmem:[%s167 + $0x60] sm:$0xff] %vm937, %v360
      %951 = vst.msk [vmem:[%s167 + $0x68] sm:$0xff] %vm937, %v365
      %952 = vst.msk [vmem:[%s167 + $0x70] sm:$0xff] %vm937, %v370
      %953 = vst.msk [vmem:[%s167 + $0x78] sm:$0xff] %vm937, %v375
      %954 = vst.msk [vmem:[%s167 + $0x80] sm:$0xff] %vm937, %v380
      %955 = vst.msk [vmem:[%s167 + $0x88] sm:$0xff] %vm937, %v385
      %956 = vst.msk [vmem:[%s167 + $0x90] sm:$0xff] %vm937, %v390
      %957 = vst.msk [vmem:[%s167 + $0x98] sm:$0xff] %vm937, %v395
      %958 = vst.msk [vmem:[%s167 + $0xa0] sm:$0xff] %vm937, %v400
      %959 = vst.msk [vmem:[%s167 + $0xa8] sm:$0xff] %vm937, %v405
      %960 = vst.msk [vmem:[%s167 + $0xb0] sm:$0xff] %vm937, %v410
      %961 = vst.msk [vmem:[%s167 + $0xb8] sm:$0xff] %vm937, %v415
      %962 = vst.msk [vmem:[%s167 + $0xc0] sm:$0xff] %vm937, %v420
      %963 = vst.msk [vmem:[%s167 + $0xc8] sm:$0xff] %vm937, %v425
      %964 = vst.msk [vmem:[%s167 + $0xd0] sm:$0xff] %vm937, %v430
      %965 = vst.msk [vmem:[%s167 + $0xd8] sm:$0xff] %vm937, %v435
      %966 = vst.msk [vmem:[%s167 + $0xe0] sm:$0xff] %vm937, %v440
      %967 = vst.msk [vmem:[%s167 + $0xe8] sm:$0xff] %vm937, %v445
      %968 = vst.msk [vmem:[%s167 + $0xf0] sm:$0xff] %vm937, %v450
      %969 = vst.msk [vmem:[%s167 + $0xf8] sm:$0xff] %vm937, %v455
      %970 = vst.msk [vmem:[%s167 + $0x100] sm:$0xff] %vm937, %v460
      %971 = vst.msk [vmem:[%s167 + $0x108] sm:$0xff] %vm937, %v465
      %972 = vst.msk [vmem:[%s167 + $0x110] sm:$0xff] %vm937, %v470
      %973 = vst.msk [vmem:[%s167 + $0x118] sm:$0xff] %vm937, %v475
      %974 = vst.msk [vmem:[%s167 + $0x120] sm:$0xff] %vm937, %v480
      %975 = vst.msk [vmem:[%s167 + $0x128] sm:$0xff] %vm937, %v485
      %976 = vst.msk [vmem:[%s167 + $0x130] sm:$0xff] %vm937, %v490
      %977 = vst.msk [vmem:[%s167 + $0x138] sm:$0xff] %vm937, %v495
      %978 = vst.msk [vmem:[%s167 + $0x140] sm:$0xff] %vm937, %v500
      %979 = vst.msk [vmem:[%s167 + $0x148] sm:$0xff] %vm937, %v505
      %980 = vst.msk [vmem:[%s167 + $0x150] sm:$0xff] %vm937, %v510
      %981 = vst.msk [vmem:[%s167 + $0x158] sm:$0xff] %vm937, %v515
      %982 = vst.msk [vmem:[%s167 + $0x160] sm:$0xff] %vm937, %v520
      %983 = vst.msk [vmem:[%s167 + $0x168] sm:$0xff] %vm937, %v525
      %984 = vst.msk [vmem:[%s167 + $0x170] sm:$0xff] %vm937, %v530
      %985 = vst.msk [vmem:[%s167 + $0x178] sm:$0xff] %vm937, %v535
      %986 = vst.msk [vmem:[%s167 + $0x180] sm:$0xff] %vm937, %v540
      %987 = vst.msk [vmem:[%s167 + $0x188] sm:$0xff] %vm937, %v545
      %988 = vst.msk [vmem:[%s167 + $0x190] sm:$0xff] %vm937, %v550
      %989 = vst.msk [vmem:[%s167 + $0x198] sm:$0xff] %vm937, %v555
      %990 = vst.msk [vmem:[%s167 + $0x1a0] sm:$0xff] %vm937, %v560
      %991 = vst.msk [vmem:[%s167 + $0x1a8] sm:$0xff] %vm937, %v565
      %992 = vst.msk [vmem:[%s167 + $0x1b0] sm:$0xff] %vm937, %v570
      %993 = vst.msk [vmem:[%s167 + $0x1b8] sm:$0xff] %vm937, %v575
      %994 = vst.msk [vmem:[%s167 + $0x1c0] sm:$0xff] %vm937, %v580
      %995 = vst.msk [vmem:[%s167 + $0x1c8] sm:$0xff] %vm937, %v585
      %996 = vst.msk [vmem:[%s167 + $0x1d0] sm:$0xff] %vm937, %v590
      %997 = vst.msk [vmem:[%s167 + $0x1d8] sm:$0xff] %vm937, %v595
      %998 = vst.msk [vmem:[%s167 + $0x1e0] sm:$0xff] %vm937, %v600
      %999 = vst.msk [vmem:[%s167 + $0x1e8] sm:$0xff] %vm937, %v605
      %1000 = vst.msk [vmem:[%s167 + $0x1f0] sm:$0xff] %vm937, %v610
      %1001 = vst.msk [vmem:[%s167 + $0x1f8] sm:$0xff] %vm937, %v615
      %1002 = vst.msk [vmem:[%s167 + $0x200] sm:$0xff] %vm937, %v620
      %1003 = vst.msk [vmem:[%s167 + $0x208] sm:$0xff] %vm937, %v625
      %1004 = vst.msk [vmem:[%s167 + $0x210] sm:$0xff] %vm937, %v630
      %1005 = vst.msk [vmem:[%s167 + $0x218] sm:$0xff] %vm937, %v635
      %1006 = vst.msk [vmem:[%s167 + $0x220] sm:$0xff] %vm937, %v640
      %1007 = vst.msk [vmem:[%s167 + $0x228] sm:$0xff] %vm937, %v645
      %1008 = vst.msk [vmem:[%s167 + $0x230] sm:$0xff] %vm937, %v650
      %1009 = vst.msk [vmem:[%s167 + $0x238] sm:$0xff] %vm937, %v655
      %1010 = vst.msk [vmem:[%s167 + $0x240] sm:$0xff] %vm937, %v660
      %1011 = vst.msk [vmem:[%s167 + $0x248] sm:$0xff] %vm937, %v665
      %1012 = vst.msk [vmem:[%s167 + $0x250] sm:$0xff] %vm937, %v670
      %1013 = vst.msk [vmem:[%s167 + $0x258] sm:$0xff] %vm937, %v675
      %1014 = vst.msk [vmem:[%s167 + $0x260] sm:$0xff] %vm937, %v680
      %1015 = vst.msk [vmem:[%s167 + $0x268] sm:$0xff] %vm937, %v685
      %1016 = vst.msk [vmem:[%s167 + $0x270] sm:$0xff] %vm937, %v690
      %1017 = vst.msk [vmem:[%s167 + $0x278] sm:$0xff] %vm937, %v695
      %1018 = vst.msk [vmem:[%s167 + $0x280] sm:$0xff] %vm937, %v700
      %1019 = vst.msk [vmem:[%s167 + $0x288] sm:$0xff] %vm937, %v705
      %1020 = vst.msk [vmem:[%s167 + $0x290] sm:$0xff] %vm937, %v710
      %1021 = vst.msk [vmem:[%s167 + $0x298] sm:$0xff] %vm937, %v715
      %1022 = vst.msk [vmem:[%s167 + $0x2a0] sm:$0xff] %vm937, %v720
      %1023 = vst.msk [vmem:[%s167 + $0x2a8] sm:$0xff] %vm937, %v725
      %1024 = vst.msk [vmem:[%s167 + $0x2b0] sm:$0xff] %vm937, %v730
      %1025 = vst.msk [vmem:[%s167 + $0x2b8] sm:$0xff] %vm937, %v735
      %1026 = vst.msk [vmem:[%s167 + $0x2c0] sm:$0xff] %vm937, %v740
      %1027 = vst.msk [vmem:[%s167 + $0x2c8] sm:$0xff] %vm937, %v745
      %1028 = vst.msk [vmem:[%s167 + $0x2d0] sm:$0xff] %vm937, %v750
      %1029 = vst.msk [vmem:[%s167 + $0x2d8] sm:$0xff] %vm937, %v755
      %1030 = vst.msk [vmem:[%s167 + $0x2e0] sm:$0xff] %vm937, %v760
      %1031 = vst.msk [vmem:[%s167 + $0x2e8] sm:$0xff] %vm937, %v765
      %1032 = vst.msk [vmem:[%s167 + $0x2f0] sm:$0xff] %vm937, %v770
      %1033 = vst.msk [vmem:[%s167 + $0x2f8] sm:$0xff] %vm937, %v775
      %1034 = vst.msk [vmem:[%s167 + $0x300] sm:$0xff] %vm937, %v780
      %1035 = vst.msk [vmem:[%s167 + $0x308] sm:$0xff] %vm937, %v785
      %1036 = vst.msk [vmem:[%s167 + $0x310] sm:$0xff] %vm937, %v790
      %1037 = vst.msk [vmem:[%s167 + $0x318] sm:$0xff] %vm937, %v795
      %1038 = vst.msk [vmem:[%s167 + $0x320] sm:$0xff] %vm937, %v800
      %1039 = vst.msk [vmem:[%s167 + $0x328] sm:$0xff] %vm937, %v805
      %1040 = vst.msk [vmem:[%s167 + $0x330] sm:$0xff] %vm937, %v810
      %1041 = vst.msk [vmem:[%s167 + $0x338] sm:$0xff] %vm937, %v815
      %1042 = vst.msk [vmem:[%s167 + $0x340] sm:$0xff] %vm937, %v820
      %1043 = vst.msk [vmem:[%s167 + $0x348] sm:$0xff] %vm937, %v825
      %1044 = vst.msk [vmem:[%s167 + $0x350] sm:$0xff] %vm937, %v830
      %1045 = vst.msk [vmem:[%s167 + $0x358] sm:$0xff] %vm937, %v835
      %1046 = vst.msk [vmem:[%s167 + $0x360] sm:$0xff] %vm937, %v840
      %1047 = vst.msk [vmem:[%s167 + $0x368] sm:$0xff] %vm937, %v845
      %1048 = vst.msk [vmem:[%s167 + $0x370] sm:$0xff] %vm937, %v850
      %1049 = vst.msk [vmem:[%s167 + $0x378] sm:$0xff] %vm937, %v855
      %1050 = vst.msk [vmem:[%s167 + $0x380] sm:$0xff] %vm937, %v860
      %1051 = vst.msk [vmem:[%s167 + $0x388] sm:$0xff] %vm937, %v865
      %1052 = vst.msk [vmem:[%s167 + $0x390] sm:$0xff] %vm937, %v870
      %1053 = vst.msk [vmem:[%s167 + $0x398] sm:$0xff] %vm937, %v875
      %1054 = vst.msk [vmem:[%s167 + $0x3a0] sm:$0xff] %vm937, %v880
      %1055 = vst.msk [vmem:[%s167 + $0x3a8] sm:$0xff] %vm937, %v885
      %1056 = vst.msk [vmem:[%s167 + $0x3b0] sm:$0xff] %vm937, %v890
      %1057 = vst.msk [vmem:[%s167 + $0x3b8] sm:$0xff] %vm937, %v895
      %1058 = vst.msk [vmem:[%s167 + $0x3c0] sm:$0xff] %vm937, %v900
      %1059 = vst.msk [vmem:[%s167 + $0x3c8] sm:$0xff] %vm937, %v905
      %1060 = vst.msk [vmem:[%s167 + $0x3d0] sm:$0xff] %vm937, %v910
      %1061 = vst.msk [vmem:[%s167 + $0x3d8] sm:$0xff] %vm937, %v915
      %1062 = vst.msk [vmem:[%s167 + $0x3e0] sm:$0xff] %vm937, %v920
      %1063 = vst.msk [vmem:[%s167 + $0x3e8] sm:$0xff] %vm937, %v925
      %1064 = vst.msk [vmem:[%s167 + $0x3f0] sm:$0xff] %vm937, %v930
      %1065 = vst.msk [vmem:[%s167 + $0x3f8] sm:$0xff] %vm937, %v935
      %v1066 = vld [vmem:[%s1] sm:$0x1]
      %v1067 = vld [vmem:[%s1 + $0x1] sm:$0x1]
      %v1068 = vld [vmem:[%s1 + $0x2] sm:$0x1]
      %v1069 = vld [vmem:[%s1 + $0x3] sm:$0x1]
      %v1070 = vld [vmem:[%s1 + $0x4] sm:$0x1]
      %v1071 = vld [vmem:[%s1 + $0x5] sm:$0x1]
      %v1072 = vld [vmem:[%s1 + $0x6] sm:$0x1]
      %v1073 = vld [vmem:[%s1 + $0x7] sm:$0x1]
      %v1074 = vld [vmem:[%s1 + $0x8] sm:$0x1]
      %v1075 = vld [vmem:[%s1 + $0x9] sm:$0x1]
      %v1076 = vld [vmem:[%s1 + $0xa] sm:$0x1]
      %v1077 = vld [vmem:[%s1 + $0xb] sm:$0x1]
      %v1078 = vld [vmem:[%s1 + $0xc] sm:$0x1]
      %v1079 = vld [vmem:[%s1 + $0xd] sm:$0x1]
      %v1080 = vld [vmem:[%s1 + $0xe] sm:$0x1]
      %v1081 = vld [vmem:[%s1 + $0xf] sm:$0x1]
      %v1082 = vld [vmem:[%s1 + $0x10] sm:$0x1]
      %v1083 = vld [vmem:[%s1 + $0x11] sm:$0x1]
      %v1084 = vld [vmem:[%s1 + $0x12] sm:$0x1]
      %v1085 = vld [vmem:[%s1 + $0x13] sm:$0x1]
      %v1086 = vld [vmem:[%s1 + $0x14] sm:$0x1]
      %v1087 = vld [vmem:[%s1 + $0x15] sm:$0x1]
      %v1088 = vld [vmem:[%s1 + $0x16] sm:$0x1]
      %v1089 = vld [vmem:[%s1 + $0x17] sm:$0x1]
      %v1090 = vld [vmem:[%s1 + $0x18] sm:$0x1]
      %v1091 = vld [vmem:[%s1 + $0x19] sm:$0x1]
      %v1092 = vld [vmem:[%s1 + $0x1a] sm:$0x1]
      %v1093 = vld [vmem:[%s1 + $0x1b] sm:$0x1]
      %v1094 = vld [vmem:[%s1 + $0x1c] sm:$0x1]
      %v1095 = vld [vmem:[%s1 + $0x1d] sm:$0x1]
      %v1096 = vld [vmem:[%s1 + $0x1e] sm:$0x1]
      %v1097 = vld [vmem:[%s1 + $0x1f] sm:$0x1]
      %v1098 = vld [vmem:[%s1 + $0x20] sm:$0x1]
      %v1099 = vld [vmem:[%s1 + $0x21] sm:$0x1]
      %v1100 = vld [vmem:[%s1 + $0x22] sm:$0x1]
      %v1101 = vld [vmem:[%s1 + $0x23] sm:$0x1]
      %v1102 = vld [vmem:[%s1 + $0x24] sm:$0x1]
      %v1103 = vld [vmem:[%s1 + $0x25] sm:$0x1]
      %v1104 = vld [vmem:[%s1 + $0x26] sm:$0x1]
      %v1105 = vld [vmem:[%s1 + $0x27] sm:$0x1]
      %v1106 = vld [vmem:[%s1 + $0x28] sm:$0x1]
      %v1107 = vld [vmem:[%s1 + $0x29] sm:$0x1]
      %v1108 = vld [vmem:[%s1 + $0x2a] sm:$0x1]
      %v1109 = vld [vmem:[%s1 + $0x2b] sm:$0x1]
      %v1110 = vld [vmem:[%s1 + $0x2c] sm:$0x1]
      %v1111 = vld [vmem:[%s1 + $0x2d] sm:$0x1]
      %v1112 = vld [vmem:[%s1 + $0x2e] sm:$0x1]
      %v1113 = vld [vmem:[%s1 + $0x2f] sm:$0x1]
      %v1114 = vld [vmem:[%s1 + $0x30] sm:$0x1]
      %v1115 = vld [vmem:[%s1 + $0x31] sm:$0x1]
      %v1116 = vld [vmem:[%s1 + $0x32] sm:$0x1]
      %v1117 = vld [vmem:[%s1 + $0x33] sm:$0x1]
      %v1118 = vld [vmem:[%s1 + $0x34] sm:$0x1]
      %v1119 = vld [vmem:[%s1 + $0x35] sm:$0x1]
      %v1120 = vld [vmem:[%s1 + $0x36] sm:$0x1]
      %v1121 = vld [vmem:[%s1 + $0x37] sm:$0x1]
      %v1122 = vld [vmem:[%s1 + $0x38] sm:$0x1]
      %v1123 = vld [vmem:[%s1 + $0x39] sm:$0x1]
      %v1124 = vld [vmem:[%s1 + $0x3a] sm:$0x1]
      %v1125 = vld [vmem:[%s1 + $0x3b] sm:$0x1]
      %v1126 = vld [vmem:[%s1 + $0x3c] sm:$0x1]
      %v1127 = vld [vmem:[%s1 + $0x3d] sm:$0x1]
      %v1128 = vld [vmem:[%s1 + $0x3e] sm:$0x1]
      %v1129 = vld [vmem:[%s1 + $0x3f] sm:$0x1]
      %v1194 = vlaneseq
      %v1195 = vshrl.u32 %v1194, 7
      %v1196 = vsub.s32 0, %v1195
      %v1197 = vrot.slane %v1066, %v1196
      %v1198 = vlaneseq
      %v1199 = vshrl.u32 %v1198, 7
      %v1200 = vsub.s32 0, %v1199
      %v1201 = vrot.slane %v1067, %v1200
      %v1202 = vlaneseq
      %v1203 = vshrl.u32 %v1202, 7
      %v1204 = vsub.s32 0, %v1203
      %v1205 = vrot.slane %v1068, %v1204
      %v1206 = vlaneseq
      %v1207 = vshrl.u32 %v1206, 7
      %v1208 = vsub.s32 0, %v1207
      %v1209 = vrot.slane %v1069, %v1208
      %v1210 = vlaneseq
      %v1211 = vshrl.u32 %v1210, 7
      %v1212 = vsub.s32 0, %v1211
      %v1213 = vrot.slane %v1070, %v1212
      %v1214 = vlaneseq
      %v1215 = vshrl.u32 %v1214, 7
      %v1216 = vsub.s32 0, %v1215
      %v1217 = vrot.slane %v1071, %v1216
      %v1218 = vlaneseq
      %v1219 = vshrl.u32 %v1218, 7
      %v1220 = vsub.s32 0, %v1219
      %v1221 = vrot.slane %v1072, %v1220
      %v1222 = vlaneseq
      %v1223 = vshrl.u32 %v1222, 7
      %v1224 = vsub.s32 0, %v1223
      %v1225 = vrot.slane %v1073, %v1224
      %v1226 = vlaneseq
      %v1227 = vshrl.u32 %v1226, 7
      %v1228 = vsub.s32 0, %v1227
      %v1229 = vrot.slane %v1074, %v1228
      %v1230 = vlaneseq
      %v1231 = vshrl.u32 %v1230, 7
      %v1232 = vsub.s32 0, %v1231
      %v1233 = vrot.slane %v1075, %v1232
      %v1234 = vlaneseq
      %v1235 = vshrl.u32 %v1234, 7
      %v1236 = vsub.s32 0, %v1235
      %v1237 = vrot.slane %v1076, %v1236
      %v1238 = vlaneseq
      %v1239 = vshrl.u32 %v1238, 7
      %v1240 = vsub.s32 0, %v1239
      %v1241 = vrot.slane %v1077, %v1240
      %v1242 = vlaneseq
      %v1243 = vshrl.u32 %v1242, 7
      %v1244 = vsub.s32 0, %v1243
      %v1245 = vrot.slane %v1078, %v1244
      %v1246 = vlaneseq
      %v1247 = vshrl.u32 %v1246, 7
      %v1248 = vsub.s32 0, %v1247
      %v1249 = vrot.slane %v1079, %v1248
      %v1250 = vlaneseq
      %v1251 = vshrl.u32 %v1250, 7
      %v1252 = vsub.s32 0, %v1251
      %v1253 = vrot.slane %v1080, %v1252
      %v1254 = vlaneseq
      %v1255 = vshrl.u32 %v1254, 7
      %v1256 = vsub.s32 0, %v1255
      %v1257 = vrot.slane %v1081, %v1256
      %v1258 = vlaneseq
      %v1259 = vshrl.u32 %v1258, 7
      %v1260 = vsub.s32 0, %v1259
      %v1261 = vrot.slane %v1082, %v1260
      %v1262 = vlaneseq
      %v1263 = vshrl.u32 %v1262, 7
      %v1264 = vsub.s32 0, %v1263
      %v1265 = vrot.slane %v1083, %v1264
      %v1266 = vlaneseq
      %v1267 = vshrl.u32 %v1266, 7
      %v1268 = vsub.s32 0, %v1267
      %v1269 = vrot.slane %v1084, %v1268
      %v1270 = vlaneseq
      %v1271 = vshrl.u32 %v1270, 7
      %v1272 = vsub.s32 0, %v1271
      %v1273 = vrot.slane %v1085, %v1272
      %v1274 = vlaneseq
      %v1275 = vshrl.u32 %v1274, 7
      %v1276 = vsub.s32 0, %v1275
      %v1277 = vrot.slane %v1086, %v1276
      %v1278 = vlaneseq
      %v1279 = vshrl.u32 %v1278, 7
      %v1280 = vsub.s32 0, %v1279
      %v1281 = vrot.slane %v1087, %v1280
      %v1282 = vlaneseq
      %v1283 = vshrl.u32 %v1282, 7
      %v1284 = vsub.s32 0, %v1283
      %v1285 = vrot.slane %v1088, %v1284
      %v1286 = vlaneseq
      %v1287 = vshrl.u32 %v1286, 7
      %v1288 = vsub.s32 0, %v1287
      %v1289 = vrot.slane %v1089, %v1288
      %v1290 = vlaneseq
      %v1291 = vshrl.u32 %v1290, 7
      %v1292 = vsub.s32 0, %v1291
      %v1293 = vrot.slane %v1090, %v1292
      %v1294 = vlaneseq
      %v1295 = vshrl.u32 %v1294, 7
      %v1296 = vsub.s32 0, %v1295
      %v1297 = vrot.slane %v1091, %v1296
      %v1298 = vlaneseq
      %v1299 = vshrl.u32 %v1298, 7
      %v1300 = vsub.s32 0, %v1299
      %v1301 = vrot.slane %v1092, %v1300
      %v1302 = vlaneseq
      %v1303 = vshrl.u32 %v1302, 7
      %v1304 = vsub.s32 0, %v1303
      %v1305 = vrot.slane %v1093, %v1304
      %v1306 = vlaneseq
      %v1307 = vshrl.u32 %v1306, 7
      %v1308 = vsub.s32 0, %v1307
      %v1309 = vrot.slane %v1094, %v1308
      %v1310 = vlaneseq
      %v1311 = vshrl.u32 %v1310, 7
      %v1312 = vsub.s32 0, %v1311
      %v1313 = vrot.slane %v1095, %v1312
      %v1314 = vlaneseq
      %v1315 = vshrl.u32 %v1314, 7
      %v1316 = vsub.s32 0, %v1315
      %v1317 = vrot.slane %v1096, %v1316
      %v1318 = vlaneseq
      %v1319 = vshrl.u32 %v1318, 7
      %v1320 = vsub.s32 0, %v1319
      %v1321 = vrot.slane %v1097, %v1320
      %v1322 = vlaneseq
      %v1323 = vshrl.u32 %v1322, 7
      %v1324 = vsub.s32 0, %v1323
      %v1325 = vrot.slane %v1098, %v1324
      %v1326 = vlaneseq
      %v1327 = vshrl.u32 %v1326, 7
      %v1328 = vsub.s32 0, %v1327
      %v1329 = vrot.slane %v1099, %v1328
      %v1330 = vlaneseq
      %v1331 = vshrl.u32 %v1330, 7
      %v1332 = vsub.s32 0, %v1331
      %v1333 = vrot.slane %v1100, %v1332
      %v1334 = vlaneseq
      %v1335 = vshrl.u32 %v1334, 7
      %v1336 = vsub.s32 0, %v1335
      %v1337 = vrot.slane %v1101, %v1336
      %v1338 = vlaneseq
      %v1339 = vshrl.u32 %v1338, 7
      %v1340 = vsub.s32 0, %v1339
      %v1341 = vrot.slane %v1102, %v1340
      %v1342 = vlaneseq
      %v1343 = vshrl.u32 %v1342, 7
      %v1344 = vsub.s32 0, %v1343
      %v1345 = vrot.slane %v1103, %v1344
      %v1346 = vlaneseq
      %v1347 = vshrl.u32 %v1346, 7
      %v1348 = vsub.s32 0, %v1347
      %v1349 = vrot.slane %v1104, %v1348
      %v1350 = vlaneseq
      %v1351 = vshrl.u32 %v1350, 7
      %v1352 = vsub.s32 0, %v1351
      %v1353 = vrot.slane %v1105, %v1352
      %v1354 = vlaneseq
      %v1355 = vshrl.u32 %v1354, 7
      %v1356 = vsub.s32 0, %v1355
      %v1357 = vrot.slane %v1106, %v1356
      %v1358 = vlaneseq
      %v1359 = vshrl.u32 %v1358, 7
      %v1360 = vsub.s32 0, %v1359
      %v1361 = vrot.slane %v1107, %v1360
      %v1362 = vlaneseq
      %v1363 = vshrl.u32 %v1362, 7
      %v1364 = vsub.s32 0, %v1363
      %v1365 = vrot.slane %v1108, %v1364
      %v1366 = vlaneseq
      %v1367 = vshrl.u32 %v1366, 7
      %v1368 = vsub.s32 0, %v1367
      %v1369 = vrot.slane %v1109, %v1368
      %v1370 = vlaneseq
      %v1371 = vshrl.u32 %v1370, 7
      %v1372 = vsub.s32 0, %v1371
      %v1373 = vrot.slane %v1110, %v1372
      %v1374 = vlaneseq
      %v1375 = vshrl.u32 %v1374, 7
      %v1376 = vsub.s32 0, %v1375
      %v1377 = vrot.slane %v1111, %v1376
      %v1378 = vlaneseq
      %v1379 = vshrl.u32 %v1378, 7
      %v1380 = vsub.s32 0, %v1379
      %v1381 = vrot.slane %v1112, %v1380
      %v1382 = vlaneseq
      %v1383 = vshrl.u32 %v1382, 7
      %v1384 = vsub.s32 0, %v1383
      %v1385 = vrot.slane %v1113, %v1384
      %v1386 = vlaneseq
      %v1387 = vshrl.u32 %v1386, 7
      %v1388 = vsub.s32 0, %v1387
      %v1389 = vrot.slane %v1114, %v1388
      %v1390 = vlaneseq
      %v1391 = vshrl.u32 %v1390, 7
      %v1392 = vsub.s32 0, %v1391
      %v1393 = vrot.slane %v1115, %v1392
      %v1394 = vlaneseq
      %v1395 = vshrl.u32 %v1394, 7
      %v1396 = vsub.s32 0, %v1395
      %v1397 = vrot.slane %v1116, %v1396
      %v1398 = vlaneseq
      %v1399 = vshrl.u32 %v1398, 7
      %v1400 = vsub.s32 0, %v1399
      %v1401 = vrot.slane %v1117, %v1400
      %v1402 = vlaneseq
      %v1403 = vshrl.u32 %v1402, 7
      %v1404 = vsub.s32 0, %v1403
      %v1405 = vrot.slane %v1118, %v1404
      %v1406 = vlaneseq
      %v1407 = vshrl.u32 %v1406, 7
      %v1408 = vsub.s32 0, %v1407
      %v1409 = vrot.slane %v1119, %v1408
      %v1410 = vlaneseq
      %v1411 = vshrl.u32 %v1410, 7
      %v1412 = vsub.s32 0, %v1411
      %v1413 = vrot.slane %v1120, %v1412
      %v1414 = vlaneseq
      %v1415 = vshrl.u32 %v1414, 7
      %v1416 = vsub.s32 0, %v1415
      %v1417 = vrot.slane %v1121, %v1416
      %v1418 = vlaneseq
      %v1419 = vshrl.u32 %v1418, 7
      %v1420 = vsub.s32 0, %v1419
      %v1421 = vrot.slane %v1122, %v1420
      %v1422 = vlaneseq
      %v1423 = vshrl.u32 %v1422, 7
      %v1424 = vsub.s32 0, %v1423
      %v1425 = vrot.slane %v1123, %v1424
      %v1426 = vlaneseq
      %v1427 = vshrl.u32 %v1426, 7
      %v1428 = vsub.s32 0, %v1427
      %v1429 = vrot.slane %v1124, %v1428
      %v1430 = vlaneseq
      %v1431 = vshrl.u32 %v1430, 7
      %v1432 = vsub.s32 0, %v1431
      %v1433 = vrot.slane %v1125, %v1432
      %v1434 = vlaneseq
      %v1435 = vshrl.u32 %v1434, 7
      %v1436 = vsub.s32 0, %v1435
      %v1437 = vrot.slane %v1126, %v1436
      %v1438 = vlaneseq
      %v1439 = vshrl.u32 %v1438, 7
      %v1440 = vsub.s32 0, %v1439
      %v1441 = vrot.slane %v1127, %v1440
      %v1442 = vlaneseq
      %v1443 = vshrl.u32 %v1442, 7
      %v1444 = vsub.s32 0, %v1443
      %v1445 = vrot.slane %v1128, %v1444
      %v1446 = vlaneseq
      %v1447 = vshrl.u32 %v1446, 7
      %v1448 = vsub.s32 0, %v1447
      %v1449 = vrot.slane %v1129, %v1448
      %s1514 = scalar_lea.vmem %s167, 1024
      %1515 = vst.msk [vmem:[%s1514] sm:$0xff] %vm937, %v1197
      %1516 = vst.msk [vmem:[%s1514 + $0x8] sm:$0xff] %vm937, %v1197
      %1517 = vst.msk [vmem:[%s1514 + $0x10] sm:$0xff] %vm937, %v1201
      %1518 = vst.msk [vmem:[%s1514 + $0x18] sm:$0xff] %vm937, %v1201
      %1519 = vst.msk [vmem:[%s1514 + $0x20] sm:$0xff] %vm937, %v1205
      %1520 = vst.msk [vmem:[%s1514 + $0x28] sm:$0xff] %vm937, %v1205
      %1521 = vst.msk [vmem:[%s1514 + $0x30] sm:$0xff] %vm937, %v1209
      %1522 = vst.msk [vmem:[%s1514 + $0x38] sm:$0xff] %vm937, %v1209
      %1523 = vst.msk [vmem:[%s1514 + $0x40] sm:$0xff] %vm937, %v1213
      %1524 = vst.msk [vmem:[%s1514 + $0x48] sm:$0xff] %vm937, %v1213
      %1525 = vst.msk [vmem:[%s1514 + $0x50] sm:$0xff] %vm937, %v1217
      %1526 = vst.msk [vmem:[%s1514 + $0x58] sm:$0xff] %vm937, %v1217
      %1527 = vst.msk [vmem:[%s1514 + $0x60] sm:$0xff] %vm937, %v1221
      %1528 = vst.msk [vmem:[%s1514 + $0x68] sm:$0xff] %vm937, %v1221
      %1529 = vst.msk [vmem:[%s1514 + $0x70] sm:$0xff] %vm937, %v1225
      %1530 = vst.msk [vmem:[%s1514 + $0x78] sm:$0xff] %vm937, %v1225
      %1531 = vst.msk [vmem:[%s1514 + $0x80] sm:$0xff] %vm937, %v1229
      %1532 = vst.msk [vmem:[%s1514 + $0x88] sm:$0xff] %vm937, %v1229
      %1533 = vst.msk [vmem:[%s1514 + $0x90] sm:$0xff] %vm937, %v1233
      %1534 = vst.msk [vmem:[%s1514 + $0x98] sm:$0xff] %vm937, %v1233
      %1535 = vst.msk [vmem:[%s1514 + $0xa0] sm:$0xff] %vm937, %v1237
      %1536 = vst.msk [vmem:[%s1514 + $0xa8] sm:$0xff] %vm937, %v1237
      %1537 = vst.msk [vmem:[%s1514 + $0xb0] sm:$0xff] %vm937, %v1241
      %1538 = vst.msk [vmem:[%s1514 + $0xb8] sm:$0xff] %vm937, %v1241
      %1539 = vst.msk [vmem:[%s1514 + $0xc0] sm:$0xff] %vm937, %v1245
      %1540 = vst.msk [vmem:[%s1514 + $0xc8] sm:$0xff] %vm937, %v1245
      %1541 = vst.msk [vmem:[%s1514 + $0xd0] sm:$0xff] %vm937, %v1249
      %1542 = vst.msk [vmem:[%s1514 + $0xd8] sm:$0xff] %vm937, %v1249
      %1543 = vst.msk [vmem:[%s1514 + $0xe0] sm:$0xff] %vm937, %v1253
      %1544 = vst.msk [vmem:[%s1514 + $0xe8] sm:$0xff] %vm937, %v1253
      %1545 = vst.msk [vmem:[%s1514 + $0xf0] sm:$0xff] %vm937, %v1257
      %1546 = vst.msk [vmem:[%s1514 + $0xf8] sm:$0xff] %vm937, %v1257
      %1547 = vst.msk [vmem:[%s1514 + $0x100] sm:$0xff] %vm937, %v1261
      %1548 = vst.msk [vmem:[%s1514 + $0x108] sm:$0xff] %vm937, %v1261
      %1549 = vst.msk [vmem:[%s1514 + $0x110] sm:$0xff] %vm937, %v1265
      %1550 = vst.msk [vmem:[%s1514 + $0x118] sm:$0xff] %vm937, %v1265
      %1551 = vst.msk [vmem:[%s1514 + $0x120] sm:$0xff] %vm937, %v1269
      %1552 = vst.msk [vmem:[%s1514 + $0x128] sm:$0xff] %vm937, %v1269
      %1553 = vst.msk [vmem:[%s1514 + $0x130] sm:$0xff] %vm937, %v1273
      %1554 = vst.msk [vmem:[%s1514 + $0x138] sm:$0xff] %vm937, %v1273
      %1555 = vst.msk [vmem:[%s1514 + $0x140] sm:$0xff] %vm937, %v1277
      %1556 = vst.msk [vmem:[%s1514 + $0x148] sm:$0xff] %vm937, %v1277
      %1557 = vst.msk [vmem:[%s1514 + $0x150] sm:$0xff] %vm937, %v1281
      %1558 = vst.msk [vmem:[%s1514 + $0x158] sm:$0xff] %vm937, %v1281
      %1559 = vst.msk [vmem:[%s1514 + $0x160] sm:$0xff] %vm937, %v1285
      %1560 = vst.msk [vmem:[%s1514 + $0x168] sm:$0xff] %vm937, %v1285
      %1561 = vst.msk [vmem:[%s1514 + $0x170] sm:$0xff] %vm937, %v1289
      %1562 = vst.msk [vmem:[%s1514 + $0x178] sm:$0xff] %vm937, %v1289
      %1563 = vst.msk [vmem:[%s1514 + $0x180] sm:$0xff] %vm937, %v1293
      %1564 = vst.msk [vmem:[%s1514 + $0x188] sm:$0xff] %vm937, %v1293
      %1565 = vst.msk [vmem:[%s1514 + $0x190] sm:$0xff] %vm937, %v1297
      %1566 = vst.msk [vmem:[%s1514 + $0x198] sm:$0xff] %vm937, %v1297
      %1567 = vst.msk [vmem:[%s1514 + $0x1a0] sm:$0xff] %vm937, %v1301
      %1568 = vst.msk [vmem:[%s1514 + $0x1a8] sm:$0xff] %vm937, %v1301
      %1569 = vst.msk [vmem:[%s1514 + $0x1b0] sm:$0xff] %vm937, %v1305
      %1570 = vst.msk [vmem:[%s1514 + $0x1b8] sm:$0xff] %vm937, %v1305
      %1571 = vst.msk [vmem:[%s1514 + $0x1c0] sm:$0xff] %vm937, %v1309
      %1572 = vst.msk [vmem:[%s1514 + $0x1c8] sm:$0xff] %vm937, %v1309
      %1573 = vst.msk [vmem:[%s1514 + $0x1d0] sm:$0xff] %vm937, %v1313
      %1574 = vst.msk [vmem:[%s1514 + $0x1d8] sm:$0xff] %vm937, %v1313
      %1575 = vst.msk [vmem:[%s1514 + $0x1e0] sm:$0xff] %vm937, %v1317
      %1576 = vst.msk [vmem:[%s1514 + $0x1e8] sm:$0xff] %vm937, %v1317
      %1577 = vst.msk [vmem:[%s1514 + $0x1f0] sm:$0xff] %vm937, %v1321
      %1578 = vst.msk [vmem:[%s1514 + $0x1f8] sm:$0xff] %vm937, %v1321
      %1579 = vst.msk [vmem:[%s1514 + $0x200] sm:$0xff] %vm937, %v1325
      %1580 = vst.msk [vmem:[%s1514 + $0x208] sm:$0xff] %vm937, %v1325
      %1581 = vst.msk [vmem:[%s1514 + $0x210] sm:$0xff] %vm937, %v1329
      %1582 = vst.msk [vmem:[%s1514 + $0x218] sm:$0xff] %vm937, %v1329
      %1583 = vst.msk [vmem:[%s1514 + $0x220] sm:$0xff] %vm937, %v1333
      %1584 = vst.msk [vmem:[%s1514 + $0x228] sm:$0xff] %vm937, %v1333
      %1585 = vst.msk [vmem:[%s1514 + $0x230] sm:$0xff] %vm937, %v1337
      %1586 = vst.msk [vmem:[%s1514 + $0x238] sm:$0xff] %vm937, %v1337
      %1587 = vst.msk [vmem:[%s1514 + $0x240] sm:$0xff] %vm937, %v1341
      %1588 = vst.msk [vmem:[%s1514 + $0x248] sm:$0xff] %vm937, %v1341
      %1589 = vst.msk [vmem:[%s1514 + $0x250] sm:$0xff] %vm937, %v1345
      %1590 = vst.msk [vmem:[%s1514 + $0x258] sm:$0xff] %vm937, %v1345
      %1591 = vst.msk [vmem:[%s1514 + $0x260] sm:$0xff] %vm937, %v1349
      %1592 = vst.msk [vmem:[%s1514 + $0x268] sm:$0xff] %vm937, %v1349
      %1593 = vst.msk [vmem:[%s1514 + $0x270] sm:$0xff] %vm937, %v1353
      %1594 = vst.msk [vmem:[%s1514 + $0x278] sm:$0xff] %vm937, %v1353
      %1595 = vst.msk [vmem:[%s1514 + $0x280] sm:$0xff] %vm937, %v1357
      %1596 = vst.msk [vmem:[%s1514 + $0x288] sm:$0xff] %vm937, %v1357
      %1597 = vst.msk [vmem:[%s1514 + $0x290] sm:$0xff] %vm937, %v1361
      %1598 = vst.msk [vmem:[%s1514 + $0x298] sm:$0xff] %vm937, %v1361
      %1599 = vst.msk [vmem:[%s1514 + $0x2a0] sm:$0xff] %vm937, %v1365
      %1600 = vst.msk [vmem:[%s1514 + $0x2a8] sm:$0xff] %vm937, %v1365
      %1601 = vst.msk [vmem:[%s1514 + $0x2b0] sm:$0xff] %vm937, %v1369
      %1602 = vst.msk [vmem:[%s1514 + $0x2b8] sm:$0xff] %vm937, %v1369
      %1603 = vst.msk [vmem:[%s1514 + $0x2c0] sm:$0xff] %vm937, %v1373
      %1604 = vst.msk [vmem:[%s1514 + $0x2c8] sm:$0xff] %vm937, %v1373
      %1605 = vst.msk [vmem:[%s1514 + $0x2d0] sm:$0xff] %vm937, %v1377
      %1606 = vst.msk [vmem:[%s1514 + $0x2d8] sm:$0xff] %vm937, %v1377
      %1607 = vst.msk [vmem:[%s1514 + $0x2e0] sm:$0xff] %vm937, %v1381
      %1608 = vst.msk [vmem:[%s1514 + $0x2e8] sm:$0xff] %vm937, %v1381
      %1609 = vst.msk [vmem:[%s1514 + $0x2f0] sm:$0xff] %vm937, %v1385
      %1610 = vst.msk [vmem:[%s1514 + $0x2f8] sm:$0xff] %vm937, %v1385
      %1611 = vst.msk [vmem:[%s1514 + $0x300] sm:$0xff] %vm937, %v1389
      %1612 = vst.msk [vmem:[%s1514 + $0x308] sm:$0xff] %vm937, %v1389
      %1613 = vst.msk [vmem:[%s1514 + $0x310] sm:$0xff] %vm937, %v1393
      %1614 = vst.msk [vmem:[%s1514 + $0x318] sm:$0xff] %vm937, %v1393
      %1615 = vst.msk [vmem:[%s1514 + $0x320] sm:$0xff] %vm937, %v1397
      %1616 = vst.msk [vmem:[%s1514 + $0x328] sm:$0xff] %vm937, %v1397
      %1617 = vst.msk [vmem:[%s1514 + $0x330] sm:$0xff] %vm937, %v1401
      %1618 = vst.msk [vmem:[%s1514 + $0x338] sm:$0xff] %vm937, %v1401
      %1619 = vst.msk [vmem:[%s1514 + $0x340] sm:$0xff] %vm937, %v1405
      %1620 = vst.msk [vmem:[%s1514 + $0x348] sm:$0xff] %vm937, %v1405
      %1621 = vst.msk [vmem:[%s1514 + $0x350] sm:$0xff] %vm937, %v1409
      %1622 = vst.msk [vmem:[%s1514 + $0x358] sm:$0xff] %vm937, %v1409
      %1623 = vst.msk [vmem:[%s1514 + $0x360] sm:$0xff] %vm937, %v1413
      %1624 = vst.msk [vmem:[%s1514 + $0x368] sm:$0xff] %vm937, %v1413
      %1625 = vst.msk [vmem:[%s1514 + $0x370] sm:$0xff] %vm937, %v1417
      %1626 = vst.msk [vmem:[%s1514 + $0x378] sm:$0xff] %vm937, %v1417
      %1627 = vst.msk [vmem:[%s1514 + $0x380] sm:$0xff] %vm937, %v1421
      %1628 = vst.msk [vmem:[%s1514 + $0x388] sm:$0xff] %vm937, %v1421
      %1629 = vst.msk [vmem:[%s1514 + $0x390] sm:$0xff] %vm937, %v1425
      %1630 = vst.msk [vmem:[%s1514 + $0x398] sm:$0xff] %vm937, %v1425
      %1631 = vst.msk [vmem:[%s1514 + $0x3a0] sm:$0xff] %vm937, %v1429
      %1632 = vst.msk [vmem:[%s1514 + $0x3a8] sm:$0xff] %vm937, %v1429
      %1633 = vst.msk [vmem:[%s1514 + $0x3b0] sm:$0xff] %vm937, %v1433
      %1634 = vst.msk [vmem:[%s1514 + $0x3b8] sm:$0xff] %vm937, %v1433
      %1635 = vst.msk [vmem:[%s1514 + $0x3c0] sm:$0xff] %vm937, %v1437
      %1636 = vst.msk [vmem:[%s1514 + $0x3c8] sm:$0xff] %vm937, %v1437
      %1637 = vst.msk [vmem:[%s1514 + $0x3d0] sm:$0xff] %vm937, %v1441
      %1638 = vst.msk [vmem:[%s1514 + $0x3d8] sm:$0xff] %vm937, %v1441
      %1639 = vst.msk [vmem:[%s1514 + $0x3e0] sm:$0xff] %vm937, %v1445
      %1640 = vst.msk [vmem:[%s1514 + $0x3e8] sm:$0xff] %vm937, %v1445
      %1641 = vst.msk [vmem:[%s1514 + $0x3f0] sm:$0xff] %vm937, %v1449
      %1642 = vst.msk [vmem:[%s1514 + $0x3f8] sm:$0xff] %vm937, %v1449
      %s1643 = smul.u32 2, %s18
      %p1644 = scmp.lt.s32.totalorder %s17, 1
      %s1645 = scalar_select %p1644, %s17, 1
      %p1646 = scmp.lt.s32.totalorder %s1643, 1
      %s1647 = scalar_select %p1646, %s1643, 1
      %s1648 = smul.addr %s1645, 256
      %s1649 = sadd.s32 %s1647, %s1648
      %s1650 = smul.addr %s1649, 8
      %s1651 = scalar_lea.vmem %s2, %s1650
      // Predicated region
      $region29: #{tpu_custom_call.1} parent=27 // pred_check
        %p1652 = pneg %p92
      $region30: #{tpu_custom_call.1} parent=27 // pred_check_branch
        %1654 = sbr.rel (%p1652) target = $region32
      $region31: #{tpu_custom_call.1} parent=27 // pred_region
        %s1655 = smul.u32 2, %s18
      $region32: #{tpu_custom_call.1} parent=27 // pred_fallthru
        _
    $region28: #{tpu_custom_call.1} parent=5 // pred_fallthru
      _
    %p1656 = scmp.le.s32.totalorder 2, %s8
    // Predicated region
    $region33: #{tpu_custom_call.1} parent=5 // pred_check
      %p1657 = pneg %p1656
    $region34: #{tpu_custom_call.1} parent=5 // pred_check_branch
      %1659 = sbr.rel (%p1657) target = $region36
    $region35: #{tpu_custom_call.1} parent=5 // pred_region
      %s1660 = ssub.s32 %s8, 2
      // Predicated region
      $region37: #{tpu_custom_call.1} parent=35 // pred_check
        %p1661 = pneg %p98
      $region38: #{tpu_custom_call.1} parent=35 // pred_check_branch
        %1663 = sbr.rel (%p1661) target = $region40
      $region39: #{tpu_custom_call.1} parent=35 // pred_region
        %s1664 = smul.u32 2, %s20
        %p1665 = scmp.lt.s32.totalorder %s19, 1
        %s1666 = scalar_select %p1665, %s19, 1
        %p1667 = scmp.lt.s32.totalorder %s1664, 1
        %s1668 = scalar_select %p1667, %s1664, 1
        %s1669 = smul.addr %s1666, 256
        %s1670 = sadd.s32 %s1668, %s1669
        %s1671 = smul.addr %s1670, 8
        %s1672 = scalar_lea.vmem %s2, %s1671
      $region40: #{tpu_custom_call.1} parent=35 // pred_fallthru
        _
    $region36: #{tpu_custom_call.1} parent=5 // pred_fallthru
      _
  $region6: #{tpu_custom_call.1} parent=0 // loop_footer
    %s12 = sadd.s32 1, %s8
  $region7: #{tpu_custom_call.1} parent=0 // loop_footer_branch
    %7 = sbr.rel target = $region3
  $region8: #{tpu_custom_call.1} parent=0 // loop_exit
    _

</llo_original>
